<compile_context>
chip_gen: v5e
topology: v5e:2x2
jax: 0.10.0
libtpu: 0.0.40
codegen_flags: <defaults>
</compile_context>

<pallas_src>
import jax
import jax.numpy as jnp
from jax.experimental import pallas as pl
from jax.experimental.pallas import tpu as pltpu

LEAKY_SLOPE = 0.01
BN_EPS = 1e-5


def _round_up(n, m=128):
    return ((n + m - 1) // m) * m


def _leaky_relu(v):
    # slope in (0, 1)  =>  LeakyReLU(v) == max(v, slope * v): one mul + one max.
    return jnp.maximum(v, LEAKY_SLOPE * v)


def _batch_norm(v, gamma, beta):
    # Training-mode BatchNorm1d: batch mean, biased batch variance (two-pass form),
    # gamma folded into the inverse std so a single scale/shift pass is emitted.
    mean = jnp.mean(v, axis=0, keepdims=True)
    c = v - mean
    var = jnp.mean(c * c, axis=0, keepdims=True)
    scale = gamma * jax.lax.rsqrt(var + BN_EPS)
    return c * scale + beta


def actor_kernel(x_ref, cx_ref, w11_ref, w12_ref, w2_ref, w3_ref, vecs_ref, out_ref):
    hp = w2_ref.shape[0]        # padded hidden width (multiple of 128)
    na_p = out_ref.shape[1]     # padded num_actions width (multiple of 128)

    # Per-feature vector slab, one aligned (8, width) tile:
    # rows = [g1, be1, g2, be2, b3, 0, 0, 0].
    vecs = vecs_ref[...]
    g1, be1 = vecs[0:1, :hp], vecs[1:2, :hp]
    g2, be2 = vecs[2:3, :hp], vecs[3:4, :hp]
    b3 = vecs[4:5, :na_p]

    # Layer 1: fc1_1(x) + fc1_2(Cx) fused in-kernel (no wrapper-side concat).
    # b11/b12/b2 are omitted: constants added right before training-mode BN are
    # cancelled exactly by the mean subtraction.
    h = (jnp.dot(x_ref[...], w11_ref[...], preferred_element_type=jnp.float32)
         + jnp.dot(cx_ref[...], w12_ref[...], preferred_element_type=jnp.float32))
    h = _leaky_relu(_batch_norm(h, g1, be1))

    # Layer 2.
    h = _leaky_relu(_batch_norm(
        jnp.dot(h, w2_ref[...], preferred_element_type=jnp.float32), g2, be2))

    # Layer 3: lane-dense (padded) output slab, unmasked store.
    out_ref[...] = jnp.dot(h, w3_ref[...], preferred_element_type=jnp.float32) + b3


def pack_params(params):
    """One-time packing/padding of module parameters for the kernel (reuse it)."""
    len_states, hidden = params["w11"].shape
    classes = params["w12"].shape[0]
    num_actions = params["w3"].shape[1]

    hp = _round_up(hidden)          # lane-dense hidden
    na_p = _round_up(num_actions)   # lane-dense output
    width = max(hp, na_p)

    def pad2(a, rows, cols):
        return jnp.pad(a, ((0, rows - a.shape[0]), (0, cols - a.shape[1])))

    def row(v):
        return pad2(v, 1, width)

    vecs = jnp.concatenate(
        [row(params["g1"]), row(params["be1"]),
         row(params["g2"]), row(params["be2"]),
         row(params["b3"]),
         jnp.zeros((3, width), jnp.float32)],    # pad to a full 8-sublane tile
        axis=0).astype(jnp.float32)

    return dict(
        w11=pad2(params["w11"], len_states, hp).astype(jnp.float32),
        w12=pad2(params["w12"], classes, hp).astype(jnp.float32),
        w2=pad2(params["w2"], hp, hp).astype(jnp.float32),
        w3=pad2(params["w3"], hp, na_p).astype(jnp.float32),
        vecs=vecs,
        hidden=hidden, hidden_p=hp,
        num_actions=num_actions, num_actions_p=na_p,
        len_states=len_states, classes=classes,
    )


def actor_forward(x, cx, packed):
    """x: (B, len_states), cx: (B, classes). Returns (B, num_actions) float32."""
    B = x.shape[0]
    hp, na_p = packed["hidden_p"], packed["num_actions_p"]
    num_actions = packed["num_actions"]
    w11, w12, w2, w3, vecs = (packed["w11"], packed["w12"], packed["w2"],
                              packed["w3"], packed["vecs"])

    x = x.astype(jnp.float32)
    cx = cx.astype(jnp.float32)

    # Resident VMEM footprint (whole-batch single block) + activation scratch.
    resident_bytes = 4 * (x.size + cx.size + w11.size + w12.size + w2.size
                          + w3.size + vecs.size + B * na_p + 4 * B * hp)
    vmem_limit = int(min(64 * 2**20, 16 * 2**20 + 2 * resident_bytes))

    flops = 2 * B * ((x.shape[1] + cx.shape[1]) * hp + hp * hp + hp * na_p)
    bytes_accessed = 4 * (x.size + cx.size + w11.size + w12.size + w2.size
                          + w3.size + vecs.size + B * na_p)
    cost = pl.CostEstimate(flops=flops, transcendentals=2 * hp,
                           bytes_accessed=bytes_accessed)

    # BatchNorm needs a full-batch reduction and everything is tiny, so the whole
    # batch stays resident in VMEM as one block (single grid point).
    vmem_spec = pl.BlockSpec(memory_space=pltpu.VMEM)
    out_full = pl.pallas_call(
        actor_kernel,
        out_shape=jax.ShapeDtypeStruct((B, na_p), jnp.float32),
        in_specs=[vmem_spec] * 7,
        out_specs=vmem_spec,
        compiler_params=pltpu.CompilerParams(vmem_limit_bytes=vmem_limit),
        cost_estimate=cost,
    )(x, cx, w11, w12, w2, w3, vecs)

    return out_full[:, :num_actions]


def init_params(key, len_states, classes, num_actions, hidden):
    """Deterministic synthetic parameter init (shapes match the PyTorch module)."""
    ks = jax.random.split(key, 4)

    def lin(k, fan_in, fan_out):
        # U(-1/sqrt(fan_in), 1/sqrt(fan_in)), like torch's default Linear init.
        bound = 1.0 / jnp.sqrt(float(fan_in))
        kw, kb = jax.random.split(k)
        w = jax.random.uniform(kw, (fan_in, fan_out), jnp.float32, -bound, bound)
        b = jax.random.uniform(kb, (1, fan_out), jnp.float32, -bound, bound)
        return w, b

    w11, b11 = lin(ks[0], len_states, hidden)
    w12, b12 = lin(ks[1], classes, hidden)
    w2, b2 = lin(ks[2], hidden, hidden)
    w3, b3 = lin(ks[3], hidden, num_actions)

    return dict(
        w11=w11, b11=b11, w12=w12, b12=b12,
        g1=jnp.ones((1, hidden), jnp.float32), be1=jnp.zeros((1, hidden), jnp.float32),
        w2=w2, b2=b2,
        g2=jnp.ones((1, hidden), jnp.float32), be2=jnp.zeros((1, hidden), jnp.float32),
        w3=w3, b3=b3,
    )


def actor_reference(x, cx, params):
    """Plain-JAX reference with the ORIGINAL PyTorch math (all biases included,
    textbook biased-variance BN) — validates that dropping the pre-BN biases,
    zero-padding hidden/output, and folding gamma are exactly equivalent."""

    def bn(v, gamma, beta):
        mean = jnp.mean(v, axis=0, keepdims=True)
        var = jnp.mean((v - mean) ** 2, axis=0, keepdims=True)
        return (v - mean) / jnp.sqrt(var + BN_EPS) * gamma + beta

    def lrelu(v):
        return jnp.where(v > 0, v, LEAKY_SLOPE * v)

    h = x @ params["w11"] + params["b11"] + cx @ params["w12"] + params["b12"]
    h = lrelu(bn(h, params["g1"], params["be1"]))
    h = h @ params["w2"] + params["b2"]
    h = lrelu(bn(h, params["g2"], params["be2"]))
    return h @ params["w3"] + params["b3"]


if __name__ == "__main__":
    # Small shapes consistent with the module's forward.
    batch, len_states, classes, num_actions, hidden = 8, 32, 16, 8, 32

    key = jax.random.PRNGKey(0)
    kx, kc, kp = jax.random.split(key, 3)
    # forward does x.view(-1, len_states) / Cx.view(-1, classes); we feed them
    # already flattened to (batch, features).
    x = jax.random.normal(kx, (batch, len_states), jnp.float32)
    cx = jax.random.normal(kc, (batch, classes), jnp.float32)
    params = init_params(kp, len_states, classes, num_actions, hidden)

    ref = actor_reference(x, cx, params)

    packed = pack_params(params)
    out = jax.block_until_ready(actor_forward(x, cx, packed))

    assert out.shape == (batch, num_actions), out.shape
    assert jnp.allclose(out, ref, atol=1e-4, rtol=1e-4), "kernel mismatch vs reference"

    print("KERNEL_OK")
</pallas_src>

<mosaic_0001>
module attributes {stable_mosaic.version = 11 : i64} {
  func.func @actor_kernel(%arg0: memref<8x32xf32, #tpu.memory_space<vmem>>, %arg1: memref<8x16xf32, #tpu.memory_space<vmem>>, %arg2: memref<32x128xf32, #tpu.memory_space<vmem>>, %arg3: memref<16x128xf32, #tpu.memory_space<vmem>>, %arg4: memref<128x128xf32, #tpu.memory_space<vmem>>, %arg5: memref<128x128xf32, #tpu.memory_space<vmem>>, %arg6: memref<8x128xf32, #tpu.memory_space<vmem>>, %arg7: memref<8x128xf32, #tpu.memory_space<vmem>>) attributes {dimension_semantics = [], scalar_prefetch = 0 : i64, scratch_operands = 0 : i64, tpu.core_type = #tpu.core_type<tc>} {
    %c0 = arith.constant 0 : index
    %c0_0 = arith.constant 0 : index
    %0 = vector.load %arg6[%c0, %c0_0] : memref<8x128xf32, #tpu.memory_space<vmem>>, vector<8x128xf32>
    %1 = vector.extract_strided_slice %0 {offsets = [0, 0], sizes = [1, 128], strides = [1, 1]} : vector<8x128xf32> to vector<1x128xf32>
    %2 = vector.extract_strided_slice %0 {offsets = [1, 0], sizes = [1, 128], strides = [1, 1]} : vector<8x128xf32> to vector<1x128xf32>
    %3 = vector.extract_strided_slice %0 {offsets = [2, 0], sizes = [1, 128], strides = [1, 1]} : vector<8x128xf32> to vector<1x128xf32>
    %4 = vector.extract_strided_slice %0 {offsets = [3, 0], sizes = [1, 128], strides = [1, 1]} : vector<8x128xf32> to vector<1x128xf32>
    %5 = vector.extract_strided_slice %0 {offsets = [4, 0], sizes = [1, 128], strides = [1, 1]} : vector<8x128xf32> to vector<1x128xf32>
    %c0_1 = arith.constant 0 : index
    %c0_2 = arith.constant 0 : index
    %6 = vector.load %arg0[%c0_1, %c0_2] : memref<8x32xf32, #tpu.memory_space<vmem>>, vector<8x32xf32>
    %c0_3 = arith.constant 0 : index
    %c0_4 = arith.constant 0 : index
    %7 = vector.load %arg2[%c0_3, %c0_4] : memref<32x128xf32, #tpu.memory_space<vmem>>, vector<32x128xf32>
    %cst = arith.constant dense<0.000000e+00> : vector<8x128xf32>
    %8 = tpu.matmul %6, %7, %cst {dimension_numbers = #tpu.dot_dimension_numbers<[1], [0], [0], [1], [0, 0, 1, 1], [], []>} : vector<8x32xf32>, vector<32x128xf32>, vector<8x128xf32> -> vector<8x128xf32>
    %c0_5 = arith.constant 0 : index
    %c0_6 = arith.constant 0 : index
    %9 = vector.load %arg1[%c0_5, %c0_6] : memref<8x16xf32, #tpu.memory_space<vmem>>, vector<8x16xf32>
    %c0_7 = arith.constant 0 : index
    %c0_8 = arith.constant 0 : index
    %10 = vector.load %arg3[%c0_7, %c0_8] : memref<16x128xf32, #tpu.memory_space<vmem>>, vector<16x128xf32>
    %cst_9 = arith.constant dense<0.000000e+00> : vector<8x128xf32>
    %11 = tpu.matmul %9, %10, %cst_9 {dimension_numbers = #tpu.dot_dimension_numbers<[1], [0], [0], [1], [0, 0, 1, 1], [], []>} : vector<8x16xf32>, vector<16x128xf32>, vector<8x128xf32> -> vector<8x128xf32>
    %12 = arith.addf %8, %11 : vector<8x128xf32>
    %cst_10 = arith.constant dense<0.000000e+00> : vector<128xf32>
    %13 = vector.multi_reduction <add>, %12, %cst_10 [0] : vector<8x128xf32> to vector<128xf32>
    %14 = vector.shape_cast %13 : vector<128xf32> to vector<1x128xf32>
    %cst_11 = arith.constant 8.000000e+00 : f32
    %15 = vector.broadcast %cst_11 : f32 to vector<1x128xf32>
    %16 = arith.divf %14, %15 : vector<1x128xf32>
    %17 = vector.broadcast %16 : vector<1x128xf32> to vector<8x128xf32>
    %18 = arith.subf %12, %17 : vector<8x128xf32>
    %19 = arith.mulf %18, %18 : vector<8x128xf32>
    %cst_12 = arith.constant dense<0.000000e+00> : vector<128xf32>
    %20 = vector.multi_reduction <add>, %19, %cst_12 [0] : vector<8x128xf32> to vector<128xf32>
    %21 = vector.shape_cast %20 : vector<128xf32> to vector<1x128xf32>
    %cst_13 = arith.constant 8.000000e+00 : f32
    %22 = vector.broadcast %cst_13 : f32 to vector<1x128xf32>
    %23 = arith.divf %21, %22 : vector<1x128xf32>
    %cst_14 = arith.constant 9.99999974E-6 : f32
    %24 = vector.broadcast %cst_14 : f32 to vector<1x128xf32>
    %25 = arith.addf %23, %24 : vector<1x128xf32>
    %26 = math.rsqrt %25 : vector<1x128xf32>
    %27 = arith.mulf %1, %26 : vector<1x128xf32>
    %28 = vector.broadcast %27 : vector<1x128xf32> to vector<8x128xf32>
    %29 = arith.mulf %18, %28 : vector<8x128xf32>
    %30 = vector.broadcast %2 : vector<1x128xf32> to vector<8x128xf32>
    %31 = arith.addf %29, %30 : vector<8x128xf32>
    %cst_15 = arith.constant 0.00999999977 : f32
    %32 = vector.broadcast %cst_15 : f32 to vector<8x128xf32>
    %33 = arith.mulf %32, %31 : vector<8x128xf32>
    %34 = arith.maximumf %31, %33 : vector<8x128xf32>
    %c0_16 = arith.constant 0 : index
    %c0_17 = arith.constant 0 : index
    %35 = vector.load %arg4[%c0_16, %c0_17] : memref<128x128xf32, #tpu.memory_space<vmem>>, vector<128x128xf32>
    %cst_18 = arith.constant dense<0.000000e+00> : vector<8x128xf32>
    %36 = tpu.matmul %34, %35, %cst_18 {dimension_numbers = #tpu.dot_dimension_numbers<[1], [0], [0], [1], [0, 0, 1, 1], [], []>} : vector<8x128xf32>, vector<128x128xf32>, vector<8x128xf32> -> vector<8x128xf32>
    %cst_19 = arith.constant dense<0.000000e+00> : vector<128xf32>
    %37 = vector.multi_reduction <add>, %36, %cst_19 [0] : vector<8x128xf32> to vector<128xf32>
    %38 = vector.shape_cast %37 : vector<128xf32> to vector<1x128xf32>
    %cst_20 = arith.constant 8.000000e+00 : f32
    %39 = vector.broadcast %cst_20 : f32 to vector<1x128xf32>
    %40 = arith.divf %38, %39 : vector<1x128xf32>
    %41 = vector.broadcast %40 : vector<1x128xf32> to vector<8x128xf32>
    %42 = arith.subf %36, %41 : vector<8x128xf32>
    %43 = arith.mulf %42, %42 : vector<8x128xf32>
    %cst_21 = arith.constant dense<0.000000e+00> : vector<128xf32>
    %44 = vector.multi_reduction <add>, %43, %cst_21 [0] : vector<8x128xf32> to vector<128xf32>
    %45 = vector.shape_cast %44 : vector<128xf32> to vector<1x128xf32>
    %cst_22 = arith.constant 8.000000e+00 : f32
    %46 = vector.broadcast %cst_22 : f32 to vector<1x128xf32>
    %47 = arith.divf %45, %46 : vector<1x128xf32>
    %cst_23 = arith.constant 9.99999974E-6 : f32
    %48 = vector.broadcast %cst_23 : f32 to vector<1x128xf32>
    %49 = arith.addf %47, %48 : vector<1x128xf32>
    %50 = math.rsqrt %49 : vector<1x128xf32>
    %51 = arith.mulf %3, %50 : vector<1x128xf32>
    %52 = vector.broadcast %51 : vector<1x128xf32> to vector<8x128xf32>
    %53 = arith.mulf %42, %52 : vector<8x128xf32>
    %54 = vector.broadcast %4 : vector<1x128xf32> to vector<8x128xf32>
    %55 = arith.addf %53, %54 : vector<8x128xf32>
    %cst_24 = arith.constant 0.00999999977 : f32
    %56 = vector.broadcast %cst_24 : f32 to vector<8x128xf32>
    %57 = arith.mulf %56, %55 : vector<8x128xf32>
    %58 = arith.maximumf %55, %57 : vector<8x128xf32>
    %c0_25 = arith.constant 0 : index
    %c0_26 = arith.constant 0 : index
    %59 = vector.load %arg5[%c0_25, %c0_26] : memref<128x128xf32, #tpu.memory_space<vmem>>, vector<128x128xf32>
    %cst_27 = arith.constant dense<0.000000e+00> : vector<8x128xf32>
    %60 = tpu.matmul %58, %59, %cst_27 {dimension_numbers = #tpu.dot_dimension_numbers<[1], [0], [0], [1], [0, 0, 1, 1], [], []>} : vector<8x128xf32>, vector<128x128xf32>, vector<8x128xf32> -> vector<8x128xf32>
    %61 = vector.broadcast %5 : vector<1x128xf32> to vector<8x128xf32>
    %62 = arith.addf %60, %61 : vector<8x128xf32>
    %c0_28 = arith.constant 0 : index
    %c0_29 = arith.constant 0 : index
    %63 = vector.load %arg7[%c0_28, %c0_29] : memref<8x128xf32, #tpu.memory_space<vmem>>, vector<8x128xf32>
    tpu.vector_store %arg7[%c0_28, %c0_29], %62 {strides = array<i32>} : memref<8x128xf32, #tpu.memory_space<vmem>>, vector<8x128xf32>,
    return
  }
}

</mosaic_0001>

<llo_original>
// kernel: tpu_custom_call.1
$region0: #{tpu_custom_call.1}
  #allocation0 [shape = 'u32[]', space=smem, size = 0x4, offset = 0x4, fixed_abs, tag = 'smem constant byte address 0x4 - core index']
  #allocation1 [shape = 'u32[72,128]{1,0:T(1,128)}', space=vmem, size = 0x9000, scoped, tag = 'internal scratch']
  %s0 = inlined_call_operand.hbm [shape: f32[8,32], index: 0, kind: input, shape index: {}]
  %s1 = inlined_call_operand.hbm [shape: f32[8,16], index: 1, kind: input, shape index: {}]
  %s2 = inlined_call_operand.hbm [shape: f32[32,128], index: 2, kind: input, shape index: {}]
  %s3 = inlined_call_operand.hbm [shape: f32[16,128], index: 3, kind: input, shape index: {}]
  %s4 = inlined_call_operand.hbm [shape: f32[128,128], index: 4, kind: input, shape index: {}]
  %s5 = inlined_call_operand.hbm [shape: f32[128,128], index: 5, kind: input, shape index: {}]
  %s6 = inlined_call_operand.hbm [shape: f32[8,128], index: 6, kind: input, shape index: {}]
  %s7 = inlined_call_operand.hbm [shape: f32[8,128], index: 7, kind: output, shape index: {}]
  %s8 = sld [smem:[#allocation0]]
  $region66: #{tpu_custom_call.1} parent=0
    _
  %s10 = ssub.s32 1, %s8
  %s11 = scalar_select 0, %s10, %s8
  $region1: #{tpu_custom_call.1} parent=0
    #allocation2 [shape = 'u8[4096]{0}', space=vmem, size = 0x1000, scoped, tag = 'input window, operand 0, single buffered']
    #allocation3 [shape = 's32[1]{0}', space=sflag, size = 0x4, scoped, tag = 'scoped memory for tpu_custom_call.1']
    #allocation4 [shape = 's32[1]{0}', space=sflag, size = 0x4, scoped, tag = 'scoped memory for tpu_custom_call.1']
    #allocation5 [shape = 'u8[4096]{0}', space=vmem, size = 0x1000, scoped, tag = 'input window, operand 1, single buffered']
    #allocation6 [shape = 's32[1]{0}', space=sflag, size = 0x4, scoped, tag = 'scoped memory for tpu_custom_call.1']
    #allocation7 [shape = 'u8[16384]{0}', space=vmem, size = 0x4000, scoped, tag = 'input window, operand 2, single buffered']
    #allocation8 [shape = 'u8[8192]{0}', space=vmem, size = 0x2000, scoped, tag = 'input window, operand 3, single buffered']
    #allocation9 [shape = 's32[1]{0}', space=sflag, size = 0x4, scoped, tag = 'scoped memory for tpu_custom_call.1']
    #allocation10 [shape = 'u8[65536]{0}', space=vmem, size = 0x10000, scoped, tag = 'input window, operand 4, single buffered']
    #allocation11 [shape = 'u8[65536]{0}', space=vmem, size = 0x10000, scoped, tag = 'input window, operand 5, single buffered']
    #allocation12 [shape = 's32[1]{0}', space=sflag, size = 0x4, scoped, tag = 'scoped memory for tpu_custom_call.1']
    #allocation13 [shape = 'u8[4096]{0}', space=vmem, size = 0x1000, scoped, tag = 'input window, operand 6, single buffered']
    #allocation14 [shape = 'u8[4096]{0}', space=vmem, size = 0x1000, scoped, tag = 'output window, operand 0, single buffered']
    %12 = vsyncpa [#allocation3], 0
    %13 = vsyncpa [#allocation6], 0
    %14 = vsyncpa [#allocation9], 0
    %15 = vsyncpa [#allocation12], 0
    %16 = vsyncpa [#allocation4], 0
    // Predicated region
    $region2: #{tpu_custom_call.1} parent=1 // pred_check
      _
    $region3: #{tpu_custom_call.1} parent=1 // pred_check_branch
      %18 = sbr.rel (0) target = $region5
    $region4: #{tpu_custom_call.1} parent=1 // pred_region
      %20 = vsyncadd [#allocation3], 0
      %s22 = sshll.u32 %s0, 4
      %s23 = int_to_ptr.hbm [resolvable:$true] %s22
      %s24 = sshll.u32 [#allocation2], 4
      %s25 = int_to_ptr.vmem [resolvable:$true] %s24
      %27 = dma.hbm_to_vmem [thread:$0]  %s23, 128, %s25, [#allocation3]
    $region5: #{tpu_custom_call.1} parent=1 // pred_fallthru
      _
    // Predicated region
    $region6: #{tpu_custom_call.1} parent=1 // pred_check
      _
    $region7: #{tpu_custom_call.1} parent=1 // pred_check_branch
      %29 = sbr.rel (0) target = $region9
    $region8: #{tpu_custom_call.1} parent=1 // pred_region
      %31 = vsyncadd [#allocation6], 0
      %s33 = sshll.u32 %s1, 4
      %s34 = int_to_ptr.hbm [resolvable:$true] %s33
      %s35 = sshll.u32 [#allocation5], 4
      %s36 = int_to_ptr.vmem [resolvable:$true] %s35
      %38 = dma.hbm_to_vmem [thread:$0]  %s34, 128, %s36, [#allocation6]
    $region9: #{tpu_custom_call.1} parent=1 // pred_fallthru
      _
    // Predicated region
    $region10: #{tpu_custom_call.1} parent=1 // pred_check
      _
    $region11: #{tpu_custom_call.1} parent=1 // pred_check_branch
      %40 = sbr.rel (0) target = $region13
    $region12: #{tpu_custom_call.1} parent=1 // pred_region
      %42 = vsyncadd [#allocation6], 0
      %s43 = sshll.u32 %s2, 4
      %s44 = int_to_ptr.hbm [resolvable:$true] %s43
      %s45 = sshll.u32 [#allocation7], 4
      %s46 = int_to_ptr.vmem [resolvable:$true] %s45
      %51 = dma.hbm_to_vmem [thread:$0]  %s44, 512, %s46, [#allocation6], 128, 128, 8
    $region13: #{tpu_custom_call.1} parent=1 // pred_fallthru
      _
    // Predicated region
    $region14: #{tpu_custom_call.1} parent=1 // pred_check
      _
    $region15: #{tpu_custom_call.1} parent=1 // pred_check_branch
      %53 = sbr.rel (0) target = $region17
    $region16: #{tpu_custom_call.1} parent=1 // pred_region
      %55 = vsyncadd [#allocation9], 0
      %s56 = sshll.u32 %s3, 4
      %s57 = int_to_ptr.hbm [resolvable:$true] %s56
      %s58 = sshll.u32 [#allocation8], 4
      %s59 = int_to_ptr.vmem [resolvable:$true] %s58
      %64 = dma.hbm_to_vmem [thread:$0]  %s57, 256, %s59, [#allocation9], 128, 128, 8
    $region17: #{tpu_custom_call.1} parent=1 // pred_fallthru
      _
    // Predicated region
    $region18: #{tpu_custom_call.1} parent=1 // pred_check
      _
    $region19: #{tpu_custom_call.1} parent=1 // pred_check_branch
      %66 = sbr.rel (0) target = $region21
    $region20: #{tpu_custom_call.1} parent=1 // pred_region
      %68 = vsyncadd [#allocation9], 0
      %s69 = sshll.u32 %s4, 4
      %s70 = int_to_ptr.hbm [resolvable:$true] %s69
      %s71 = sshll.u32 [#allocation10], 4
      %s72 = int_to_ptr.vmem [resolvable:$true] %s71
      %77 = dma.hbm_to_vmem [thread:$0]  %s70, 2048, %s72, [#allocation9], 128, 128, 8
    $region21: #{tpu_custom_call.1} parent=1 // pred_fallthru
      _
    // Predicated region
    $region22: #{tpu_custom_call.1} parent=1 // pred_check
      _
    $region23: #{tpu_custom_call.1} parent=1 // pred_check_branch
      %79 = sbr.rel (0) target = $region25
    $region24: #{tpu_custom_call.1} parent=1 // pred_region
      %81 = vsyncadd [#allocation12], 0
      %s82 = sshll.u32 %s5, 4
      %s83 = int_to_ptr.hbm [resolvable:$true] %s82
      %s84 = sshll.u32 [#allocation11], 4
      %s85 = int_to_ptr.vmem [resolvable:$true] %s84
      %90 = dma.hbm_to_vmem [thread:$0]  %s83, 2048, %s85, [#allocation12], 128, 128, 8
    $region25: #{tpu_custom_call.1} parent=1 // pred_fallthru
      _
    // Predicated region
    $region26: #{tpu_custom_call.1} parent=1 // pred_check
      _
    $region27: #{tpu_custom_call.1} parent=1 // pred_check_branch
      %92 = sbr.rel (0) target = $region29
    $region28: #{tpu_custom_call.1} parent=1 // pred_region
      %94 = vsyncadd [#allocation12], 0
      %s96 = sshll.u32 %s6, 4
      %s97 = int_to_ptr.hbm [resolvable:$true] %s96
      %s98 = sshll.u32 [#allocation13], 4
      %s99 = int_to_ptr.vmem [resolvable:$true] %s98
      %101 = dma.hbm_to_vmem [thread:$0]  %s97, 128, %s99, [#allocation12]
    $region29: #{tpu_custom_call.1} parent=1 // pred_fallthru
      _
    // Predicated region
    $region30: #{tpu_custom_call.1} parent=1 // pred_check
      _
    $region31: #{tpu_custom_call.1} parent=1 // pred_check_branch
      %103 = sbr.rel (0) target = $region33
    $region32: #{tpu_custom_call.1} parent=1 // pred_region
      %105 = dma.done [#allocation3], 128
    $region33: #{tpu_custom_call.1} parent=1 // pred_fallthru
      _
    // Predicated region
    $region34: #{tpu_custom_call.1} parent=1 // pred_check
      _
    $region35: #{tpu_custom_call.1} parent=1 // pred_check_branch
      %107 = sbr.rel (0) target = $region37
    $region36: #{tpu_custom_call.1} parent=1 // pred_region
      %109 = dma.done [#allocation6], 128
    $region37: #{tpu_custom_call.1} parent=1 // pred_fallthru
      _
    // Predicated region
    $region38: #{tpu_custom_call.1} parent=1 // pred_check
      _
    $region39: #{tpu_custom_call.1} parent=1 // pred_check_branch
      %111 = sbr.rel (0) target = $region41
    $region40: #{tpu_custom_call.1} parent=1 // pred_region
      %113 = dma.done [#allocation6], 512
    $region41: #{tpu_custom_call.1} parent=1 // pred_fallthru
      _
    // Predicated region
    $region42: #{tpu_custom_call.1} parent=1 // pred_check
      _
    $region43: #{tpu_custom_call.1} parent=1 // pred_check_branch
      %115 = sbr.rel (0) target = $region45
    $region44: #{tpu_custom_call.1} parent=1 // pred_region
      %117 = dma.done [#allocation9], 256
    $region45: #{tpu_custom_call.1} parent=1 // pred_fallthru
      _
    // Predicated region
    $region46: #{tpu_custom_call.1} parent=1 // pred_check
      _
    $region47: #{tpu_custom_call.1} parent=1 // pred_check_branch
      %119 = sbr.rel (0) target = $region49
    $region48: #{tpu_custom_call.1} parent=1 // pred_region
      %121 = dma.done [#allocation9], 2048
    $region49: #{tpu_custom_call.1} parent=1 // pred_fallthru
      _
    // Predicated region
    $region50: #{tpu_custom_call.1} parent=1 // pred_check
      _
    $region51: #{tpu_custom_call.1} parent=1 // pred_check_branch
      %123 = sbr.rel (0) target = $region53
    $region52: #{tpu_custom_call.1} parent=1 // pred_region
      %125 = dma.done [#allocation12], 2048
    $region53: #{tpu_custom_call.1} parent=1 // pred_fallthru
      _
    // Predicated region
    $region54: #{tpu_custom_call.1} parent=1 // pred_check
      _
    $region55: #{tpu_custom_call.1} parent=1 // pred_check_branch
      %127 = sbr.rel (0) target = $region57
    $region56: #{tpu_custom_call.1} parent=1 // pred_region
      %129 = dma.done [#allocation12], 128
    $region57: #{tpu_custom_call.1} parent=1 // pred_fallthru
      _
    %v130 = vld [vmem:[#allocation13] sm:$0xff]
    %v131 = vld [vmem:[#allocation2] sm:$0xff]
    %v132 = vld [vmem:[#allocation7] sm:$0xff]
    %v133 = vld [vmem:[#allocation7 + $0x8] sm:$0xff]
    %v134 = vld [vmem:[#allocation7 + $0x10] sm:$0xff]
    %v135 = vld [vmem:[#allocation7 + $0x18] sm:$0xff]
    %v136 = vld [vmem:[#allocation5] sm:$0xff]
    %v137 = vld [vmem:[#allocation8] sm:$0xff]
    %v138 = vld [vmem:[#allocation8 + $0x8] sm:$0xff]
    %vm139 = vcmask 130048
    %v141 = vsel %vm139, %v136, 0
    %143 = vmatpush.msra.mxu0 0.0
    %144 = vmatpush.msra.mxu0 0.0
    %145 = vmatpush.msra.mxu0 0.0
    %146 = vmatpush.msra.mxu0 0.0
    %147 = vmatpush.msra.mxu0 0.0
    %148 = vmatpush.msra.mxu0 0.0
    %149 = vmatpush.msra.mxu0 0.0
    %150 = vmatpush.msra.mxu0 0.0
    %151 = vmatpush.msra.mxu0 0.0
    %152 = vmatpush.msra.mxu0 0.0
    %153 = vmatpush.msra.mxu0 0.0
    %154 = vmatpush.msra.mxu0 0.0
    %155 = vmatpush.msra.mxu0 0.0
    %156 = vmatpush.msra.mxu0 0.0
    %157 = vmatpush.msra.mxu0 %v138
    %158 = vmatpush.msra.mxu0 %v137
    %159 = vmatmul.f32.gmra.mxu0 %v141
    %v160 = vpop.f32.mrf.mxu0
    %v161 = vadd.f32 0.0, %v160
    %162 = vdwg.mxu0
    %vm163 = vcmask 261120
    %v165 = vsel %vm163, %v131, 0
    %167 = vmatpush.msra.mxu0 0.0
    %168 = vmatpush.msra.mxu0 0.0
    %169 = vmatpush.msra.mxu0 0.0
    %170 = vmatpush.msra.mxu0 0.0
    %171 = vmatpush.msra.mxu0 0.0
    %172 = vmatpush.msra.mxu0 0.0
    %173 = vmatpush.msra.mxu0 0.0
    %174 = vmatpush.msra.mxu0 0.0
    %175 = vmatpush.msra.mxu0 0.0
    %176 = vmatpush.msra.mxu0 0.0
    %177 = vmatpush.msra.mxu0 0.0
    %178 = vmatpush.msra.mxu0 0.0
    %179 = vmatpush.msra.mxu0 %v135
    %180 = vmatpush.msra.mxu0 %v134
    %181 = vmatpush.msra.mxu0 %v133
    %182 = vmatpush.msra.mxu0 %v132
    %183 = vmatmul.f32.gmra.mxu0 %v165
    %v184 = vpop.f32.mrf.mxu0
    %v185 = vadd.f32 %v161, %v184
    %186 = vdwg.mxu0
    %v187 = vrot.slane %v185, 4
    %v188 = vadd.f32 %v185, %v187
    %v189 = vrot.slane %v188, 2
    %v190 = vadd.f32 %v188, %v189
    %v191 = vrot.slane %v190, 1
    %v192 = vadd.f32 %v190, %v191
    %v193 = vrcp.pop 8.0
    %v194 = vmul.f32 8.0, %v193
    %v195 = vsub.f32 1.0, %v194
    %v196 = vmul.f32 %v193, %v195
    %v197 = vadd.f32 %v193, %v196
    %vm198 = vweird.f32 %v193
    %v199 = vsel %vm198, %v193, %v197
    %v200 = vmul.f32 %v192, %v199
    %v201 = vsub.f32 %v185, %v200
    %v202 = vmul.f32 %v201, %v201
    %v203 = vrot.slane %v202, 4
    %v204 = vadd.f32 %v202, %v203
    %v205 = vrot.slane %v204, 2
    %v206 = vadd.f32 %v204, %v205
    %v207 = vrot.slane %v206, 1
    %v208 = vadd.f32 %v206, %v207
    %v209 = vmul.f32 %v208, %v199
    %v210 = vadd.f32 %v209, 1e-05
    %v211 = vrsqrt.pop %v210
    %v212 = vmul.f32 %v211, %v210
    %v213 = vmul.f32 %v212, %v211
    %v214 = vmul.f32 0.5, %v213
    %v215 = vsub.f32 1.5, %v214
    %v216 = vmul.f32 %v211, %v215
    %vm217 = vweird.f32 %v210
    %vm218 = vweird.f32 %v211
    %vm219 = vmor %vm217, %vm218
    %v220 = vsel %vm219, %v211, %v216
    %v221 = vmul.f32 %v130, %v220
    %v222 = vperm.slane %v221, 0
    %v223 = vmul.f32 %v201, %v222
    %v224 = vperm.slane %v130, 1
    %v225 = vadd.f32 %v223, %v224
    %v226 = vmul.f32 %v225, 0.01
    %v227 = vmax.f32 %v225, %v226
    %v228 = vld [vmem:[#allocation10] sm:$0xff]
    %v229 = vld [vmem:[#allocation10 + $0x8] sm:$0xff]
    %v230 = vld [vmem:[#allocation10 + $0x10] sm:$0xff]
    %v231 = vld [vmem:[#allocation10 + $0x18] sm:$0xff]
    %v232 = vld [vmem:[#allocation10 + $0x20] sm:$0xff]
    %v233 = vld [vmem:[#allocation10 + $0x28] sm:$0xff]
    %v234 = vld [vmem:[#allocation10 + $0x30] sm:$0xff]
    %v235 = vld [vmem:[#allocation10 + $0x38] sm:$0xff]
    %v236 = vld [vmem:[#allocation10 + $0x40] sm:$0xff]
    %v237 = vld [vmem:[#allocation10 + $0x48] sm:$0xff]
    %v238 = vld [vmem:[#allocation10 + $0x50] sm:$0xff]
    %v239 = vld [vmem:[#allocation10 + $0x58] sm:$0xff]
    %v240 = vld [vmem:[#allocation10 + $0x60] sm:$0xff]
    %v241 = vld [vmem:[#allocation10 + $0x68] sm:$0xff]
    %v242 = vld [vmem:[#allocation10 + $0x70] sm:$0xff]
    %v243 = vld [vmem:[#allocation10 + $0x78] sm:$0xff]
    %244 = vmatpush.msra.mxu0 %v243
    %245 = vmatpush.msra.mxu0 %v242
    %246 = vmatpush.msra.mxu0 %v241
    %247 = vmatpush.msra.mxu0 %v240
    %248 = vmatpush.msra.mxu0 %v239
    %249 = vmatpush.msra.mxu0 %v238
    %250 = vmatpush.msra.mxu0 %v237
    %251 = vmatpush.msra.mxu0 %v236
    %252 = vmatpush.msra.mxu0 %v235
    %253 = vmatpush.msra.mxu0 %v234
    %254 = vmatpush.msra.mxu0 %v233
    %255 = vmatpush.msra.mxu0 %v232
    %256 = vmatpush.msra.mxu0 %v231
    %257 = vmatpush.msra.mxu0 %v230
    %258 = vmatpush.msra.mxu0 %v229
    %259 = vmatpush.msra.mxu0 %v228
    %260 = vmatmul.f32.gmra.mxu0 %v227
    %v261 = vpop.f32.mrf.mxu0
    %v262 = vadd.f32 0.0, %v261
    %263 = vdwg.mxu0
    %v264 = vrot.slane %v262, 4
    %v265 = vadd.f32 %v262, %v264
    %v266 = vrot.slane %v265, 2
    %v267 = vadd.f32 %v265, %v266
    %v268 = vrot.slane %v267, 1
    %v269 = vadd.f32 %v267, %v268
    %v270 = vmul.f32 %v269, %v199
    %v271 = vsub.f32 %v262, %v270
    %v272 = vmul.f32 %v271, %v271
    %v273 = vrot.slane %v272, 4
    %v274 = vadd.f32 %v272, %v273
    %v275 = vrot.slane %v274, 2
    %v276 = vadd.f32 %v274, %v275
    %v277 = vrot.slane %v276, 1
    %v278 = vadd.f32 %v276, %v277
    %v279 = vmul.f32 %v278, %v199
    %v280 = vadd.f32 %v279, 1e-05
    %v281 = vrsqrt.pop %v280
    %v282 = vmul.f32 %v281, %v280
    %v283 = vmul.f32 %v282, %v281
    %v284 = vmul.f32 0.5, %v283
    %v285 = vsub.f32 1.5, %v284
    %v286 = vmul.f32 %v281, %v285
    %vm287 = vweird.f32 %v280
    %vm288 = vweird.f32 %v281
    %vm289 = vmor %vm287, %vm288
    %v290 = vsel %vm289, %v281, %v286
    %v291 = vmul.f32 %v130, %v290
    %v292 = vperm.slane %v291, 2
    %v293 = vmul.f32 %v271, %v292
    %v294 = vperm.slane %v130, 3
    %v295 = vadd.f32 %v293, %v294
    %v296 = vmul.f32 %v295, 0.01
    %v297 = vmax.f32 %v295, %v296
    %v298 = vld [vmem:[#allocation11] sm:$0xff]
    %v299 = vld [vmem:[#allocation11 + $0x8] sm:$0xff]
    %v300 = vld [vmem:[#allocation11 + $0x10] sm:$0xff]
    %v301 = vld [vmem:[#allocation11 + $0x18] sm:$0xff]
    %v302 = vld [vmem:[#allocation11 + $0x20] sm:$0xff]
    %v303 = vld [vmem:[#allocation11 + $0x28] sm:$0xff]
    %v304 = vld [vmem:[#allocation11 + $0x30] sm:$0xff]
    %v305 = vld [vmem:[#allocation11 + $0x38] sm:$0xff]
    %v306 = vld [vmem:[#allocation11 + $0x40] sm:$0xff]
    %v307 = vld [vmem:[#allocation11 + $0x48] sm:$0xff]
    %v308 = vld [vmem:[#allocation11 + $0x50] sm:$0xff]
    %v309 = vld [vmem:[#allocation11 + $0x58] sm:$0xff]
    %v310 = vld [vmem:[#allocation11 + $0x60] sm:$0xff]
    %v311 = vld [vmem:[#allocation11 + $0x68] sm:$0xff]
    %v312 = vld [vmem:[#allocation11 + $0x70] sm:$0xff]
    %v313 = vld [vmem:[#allocation11 + $0x78] sm:$0xff]
    %v314 = vperm.slane %v130, 4
    %315 = vmatpush.msra.mxu0 %v313
    %316 = vmatpush.msra.mxu0 %v312
    %317 = vmatpush.msra.mxu0 %v311
    %318 = vmatpush.msra.mxu0 %v310
    %319 = vmatpush.msra.mxu0 %v309
    %320 = vmatpush.msra.mxu0 %v308
    %321 = vmatpush.msra.mxu0 %v307
    %322 = vmatpush.msra.mxu0 %v306
    %323 = vmatpush.msra.mxu0 %v305
    %324 = vmatpush.msra.mxu0 %v304
    %325 = vmatpush.msra.mxu0 %v303
    %326 = vmatpush.msra.mxu0 %v302
    %327 = vmatpush.msra.mxu0 %v301
    %328 = vmatpush.msra.mxu0 %v300
    %329 = vmatpush.msra.mxu0 %v299
    %330 = vmatpush.msra.mxu0 %v298
    %331 = vmatmul.f32.gmra.mxu0 %v297
    %v332 = vpop.f32.mrf.mxu0
    %v333 = vadd.f32 %v314, %v332
    %334 = vdwg.mxu0
    %335 = vst [vmem:[#allocation14] sm:$0xff] %v333
    // Predicated region
    $region58: #{tpu_custom_call.1} parent=1 // pred_check
      _
    $region59: #{tpu_custom_call.1} parent=1 // pred_check_branch
      %337 = sbr.rel (0) target = $region61
    $region60: #{tpu_custom_call.1} parent=1 // pred_region
      %339 = vsyncadd [#allocation4], 0
      %s341 = sshll.u32 [#allocation14], 4
      %s342 = int_to_ptr.vmem [resolvable:$true] %s341
      %s343 = sshll.u32 %s7, 4
      %s344 = int_to_ptr.hbm [resolvable:$true] %s343
      %346 = dma.vmem_to_hbm [thread:$0]  %s342, 128, %s344, [#allocation4]
    $region61: #{tpu_custom_call.1} parent=1 // pred_fallthru
      _
    // Predicated region
    $region62: #{tpu_custom_call.1} parent=1 // pred_check
      _
    $region63: #{tpu_custom_call.1} parent=1 // pred_check_branch
      %348 = sbr.rel (0) target = $region65
    $region64: #{tpu_custom_call.1} parent=1 // pred_region
      %350 = dma.done [#allocation4], 128
    $region65: #{tpu_custom_call.1} parent=1 // pred_fallthru
      _
    %351 = vsyncpa [#allocation3], 1
    %352 = vsyncpa [#allocation6], 1
    %353 = vsyncpa [#allocation9], 1
    %354 = vsyncpa [#allocation12], 1
    %355 = vsyncpa [#allocation4], 1

</llo_original>
